<compile_context>
chip_gen: v5e
topology: v5e:2x2
jax: 0.10.0
libtpu: 0.0.40
codegen_flags: <defaults>
</compile_context>

<pallas_src>
import functools

import jax
import jax.numpy as jnp
from jax import lax
from jax.experimental import pallas as pl
from jax.experimental.pallas import tpu as pltpu

EPS = 1e-5  # torch.nn.LayerNorm default


def _sublayer_connection_kernel(x_ref, w_ref, b_ref, g_ref, beta_ref, o_ref,
                                *, p, seed, keep_threshold, tm, hidden):
    # Hoist parameter loads / casts once per grid step (no per-iter re-broadcast).
    g = g_ref[...].astype(jnp.float32)        # (1, H) layernorm gamma
    beta = beta_ref[...].astype(jnp.float32)  # (1, H) layernorm beta
    b = b_ref[...].astype(jnp.float32)        # (1, H) linear bias

    x = x_ref[...].astype(jnp.float32)        # (tm, H) row tile

    # --- LayerNorm over hidden dim: single pass (sum and sum-of-squares) ---
    inv_h = jnp.float32(1.0 / hidden)
    s1 = jnp.sum(x, axis=-1, keepdims=True)
    s2 = jnp.sum(x * x, axis=-1, keepdims=True)
    mean = s1 * inv_h
    var = jnp.maximum(s2 * inv_h - mean * mean, 0.0)  # biased var, like torch
    y = (x - mean) * lax.rsqrt(var + EPS) * g + beta

    # --- sublayer := Linear(H, H) on the MXU (keep weight's native dtype, f32 acc) ---
    w = w_ref[...]
    z = jnp.dot(y.astype(w.dtype), w, preferred_element_type=jnp.float32) + b

    # --- Dropout (training semantics: keep w.p. 1-p, scale by 1/(1-p)) ---
    # Stateless hash of (global element index, seed); integer threshold compare.
    if p > 0.0:
        row = lax.broadcasted_iota(jnp.int32, z.shape, 0) + pl.program_id(0) * tm
        col = lax.broadcasted_iota(jnp.int32, z.shape, 1)
        h = (row * hidden + col).astype(jnp.uint32) ^ jnp.uint32(seed)
        # lowbias32-style mixer
        h = h ^ (h >> 16)
        h = h * jnp.uint32(0x7FEB352D)
        h = h ^ (h >> 15)
        h = h * jnp.uint32(0x846CA68B)
        h = h ^ (h >> 16)
        keep = h < jnp.uint32(keep_threshold)
        z = jnp.where(keep, z * jnp.float32(1.0 / (1.0 - p)), 0.0)

    # --- Residual add ---
    o_ref[...] = (x + z).astype(o_ref.dtype)


def _round_up(n, m):
    return (n + m - 1) // m * m


def sublayer_connection(x, w, b, gamma, beta, *, p=0.0, seed=0, tm=512,
                        donate_x=False):
    """x: [B, S, H]. Returns x + dropout(Linear(LayerNorm(x)), p)."""
    B, S, H = x.shape
    N = B * S
    xf = x.reshape(N, H)

    # Large row tile (HBM-roofline friendly); multiple of 8, clamped to the array.
    tm = max(8, min(_round_up(int(tm), 8), _round_up(N, 8)))
    grid = (pl.cdiv(N, tm),)  # ragged last tile handled by Pallas boundary masking

    if p > 0.0:
        keep_threshold = min(int(round((1.0 - float(p)) * 2.0**32)), 2**32 - 1)
    else:
        keep_threshold = 2**32 - 1
    seed_mixed = (int(seed) * 0x9E3779B1 + 0x85EBCA77) & 0xFFFFFFFF

    kernel = functools.partial(
        _sublayer_connection_kernel,
        p=float(p), seed=seed_mixed, keep_threshold=keep_threshold,
        tm=tm, hidden=H)

    # TODO(synk): for large H (e.g. >=2048 on v7x's 64 MiB VMEM) the resident (H, H)
    # f32 weight should be tiled over an output-column grid axis (or stored bf16) and
    # vmem_limit_bytes raised; at toy H this full-resident weight is only tens of KB.
    out = pl.pallas_call(
        kernel,
        out_shape=jax.ShapeDtypeStruct((N, H), x.dtype),
        grid=grid,
        in_specs=[
            pl.BlockSpec((tm, H), lambda i: (i, 0)),   # x rows (pipelined along grid)
            pl.BlockSpec((H, H), lambda i: (0, 0)),    # linear weight (resident)
            pl.BlockSpec((1, H), lambda i: (0, 0)),    # linear bias
            pl.BlockSpec((1, H), lambda i: (0, 0)),    # layernorm gamma
            pl.BlockSpec((1, H), lambda i: (0, 0)),    # layernorm beta
        ],
        out_specs=pl.BlockSpec((tm, H), lambda i: (i, 0)),
        compiler_params=pltpu.CompilerParams(
            # Row-grid axis is fully independent -> shard across v7x's 2 TensorCores;
            # neutral on single-TC v5e/v6e.
            dimension_semantics=("parallel",)),
        # Optional: reuse x's HBM buffer for the output when the caller no longer
        # needs x (each output tile is written exactly once after its x tile is read).
        input_output_aliases=({0: 0} if donate_x else {}),
    )(xf, w, b.reshape(1, H), gamma.reshape(1, H), beta.reshape(1, H))
    return out.reshape(B, S, H)


if __name__ == "__main__":
    B, S, H = 2, 8, 128
    key = jax.random.PRNGKey(0)
    kx, kw = jax.random.split(key)

    x = jax.random.normal(kx, (B, S, H), dtype=jnp.float32)

    # Deterministic params: LayerNorm weight=1 / bias=0; Linear(H, H) small weight, zero bias.
    gamma = jnp.ones((H,), jnp.float32)
    beta = jnp.zeros((H,), jnp.float32)
    w = jax.random.normal(kw, (H, H), dtype=jnp.float32) * 0.02
    b = jnp.zeros((H,), jnp.float32)

    # 1) p=0 (eval-mode dropout): check against a pure-JAX reference.
    out0 = jax.block_until_ready(sublayer_connection(x, w, b, gamma, beta, p=0.0))
    mean = jnp.mean(x, axis=-1, keepdims=True)
    var = jnp.mean((x - mean) ** 2, axis=-1, keepdims=True)
    xn = (x - mean) / jnp.sqrt(var + EPS) * gamma + beta
    ref = x + (xn @ w + b)
    assert jnp.allclose(out0, ref, atol=1e-4, rtol=1e-4), "mismatch vs reference (p=0)"

    # 2) p=0.1 (training-mode dropout): shape/dtype, tiling-independent reproducibility,
    #    and drop fraction sanity.
    out_a = jax.block_until_ready(
        sublayer_connection(x, w, b, gamma, beta, p=0.1, seed=1234, tm=8))
    out_b = jax.block_until_ready(
        sublayer_connection(x, w, b, gamma, beta, p=0.1, seed=1234, tm=16))
    assert out_a.shape == x.shape and out_a.dtype == x.dtype
    assert jnp.allclose(out_a, out_b), "dropout pattern must not depend on tile size"
    dropped_frac = float(jnp.mean((out_a == x).astype(jnp.float32)))
    assert 0.03 < dropped_frac < 0.20, f"unexpected dropout fraction {dropped_frac}"

    print("KERNEL_OK")
</pallas_src>

<mosaic_0001>
module attributes {stable_mosaic.version = 11 : i64} {
  func.func @_sublayer_connection_kernel(%arg0: i32, %arg1: memref<16x128xf32, #tpu.memory_space<vmem>>, %arg2: memref<128x128xf32, #tpu.memory_space<vmem>>, %arg3: memref<1x128xf32, #tpu.memory_space<vmem>>, %arg4: memref<1x128xf32, #tpu.memory_space<vmem>>, %arg5: memref<1x128xf32, #tpu.memory_space<vmem>>, %arg6: memref<16x128xf32, #tpu.memory_space<vmem>>) attributes {dimension_semantics = [#tpu.dimension_semantics<parallel>], iteration_bounds = array<i64: 1>, scalar_prefetch = 0 : i64, scratch_operands = 0 : i64, tpu.core_type = #tpu.core_type<tc>, window_params = [{transform_indices = @transform_0, window_bounds = array<i64: 16, 128>}, {pipeline_mode = #tpu.pipeline_mode<synchronous>, transform_indices = @transform_1, window_bounds = array<i64: 128, 128>}, {pipeline_mode = #tpu.pipeline_mode<synchronous>, transform_indices = @transform_2, window_bounds = array<i64: 1, 128>}, {pipeline_mode = #tpu.pipeline_mode<synchronous>, transform_indices = @transform_3, window_bounds = array<i64: 1, 128>}, {pipeline_mode = #tpu.pipeline_mode<synchronous>, transform_indices = @transform_4, window_bounds = array<i64: 1, 128>}, {transform_indices = @transform_5, window_bounds = array<i64: 16, 128>}]} {
    %c0 = arith.constant 0 : index
    %c0_0 = arith.constant 0 : index
    %0 = vector.load %arg4[%c0, %c0_0] : memref<1x128xf32, #tpu.memory_space<vmem>>, vector<1x128xf32>
    %c0_1 = arith.constant 0 : index
    %c0_2 = arith.constant 0 : index
    %1 = vector.load %arg5[%c0_1, %c0_2] : memref<1x128xf32, #tpu.memory_space<vmem>>, vector<1x128xf32>
    %c0_3 = arith.constant 0 : index
    %c0_4 = arith.constant 0 : index
    %2 = vector.load %arg3[%c0_3, %c0_4] : memref<1x128xf32, #tpu.memory_space<vmem>>, vector<1x128xf32>
    %c0_5 = arith.constant 0 : index
    %c0_6 = arith.constant 0 : index
    %3 = vector.load %arg1[%c0_5, %c0_6] : memref<16x128xf32, #tpu.memory_space<vmem>>, vector<16x128xf32>
    %cst = arith.constant dense<0.000000e+00> : vector<16xf32>
    %4 = vector.multi_reduction <add>, %3, %cst [1] : vector<16x128xf32> to vector<16xf32>
    %5 = vector.shape_cast %4 : vector<16xf32> to vector<16x1xf32>
    %6 = arith.mulf %3, %3 : vector<16x128xf32>
    %cst_7 = arith.constant dense<0.000000e+00> : vector<16xf32>
    %7 = vector.multi_reduction <add>, %6, %cst_7 [1] : vector<16x128xf32> to vector<16xf32>
    %8 = vector.shape_cast %7 : vector<16xf32> to vector<16x1xf32>
    %cst_8 = arith.constant 7.812500e-03 : f32
    %9 = vector.broadcast %cst_8 : f32 to vector<16x1xf32>
    %10 = arith.mulf %5, %9 : vector<16x1xf32>
    %cst_9 = arith.constant 7.812500e-03 : f32
    %11 = vector.broadcast %cst_9 : f32 to vector<16x1xf32>
    %12 = arith.mulf %8, %11 : vector<16x1xf32>
    %13 = arith.mulf %10, %10 : vector<16x1xf32>
    %14 = arith.subf %12, %13 : vector<16x1xf32>
    %cst_10 = arith.constant 0.000000e+00 : f32
    %15 = vector.broadcast %cst_10 : f32 to vector<16x1xf32>
    %16 = arith.maximumf %14, %15 : vector<16x1xf32>
    %17 = vector.broadcast %10 : vector<16x1xf32> to vector<16x128xf32>
    %18 = arith.subf %3, %17 : vector<16x128xf32>
    %cst_11 = arith.constant 9.99999974E-6 : f32
    %19 = vector.broadcast %cst_11 : f32 to vector<16x1xf32>
    %20 = arith.addf %16, %19 : vector<16x1xf32>
    %21 = math.rsqrt %20 : vector<16x1xf32>
    %22 = vector.broadcast %21 : vector<16x1xf32> to vector<16x128xf32>
    %23 = arith.mulf %18, %22 : vector<16x128xf32>
    %24 = vector.broadcast %0 : vector<1x128xf32> to vector<16x128xf32>
    %25 = arith.mulf %23, %24 : vector<16x128xf32>
    %26 = vector.broadcast %1 : vector<1x128xf32> to vector<16x128xf32>
    %27 = arith.addf %25, %26 : vector<16x128xf32>
    %c0_12 = arith.constant 0 : index
    %c0_13 = arith.constant 0 : index
    %28 = vector.load %arg2[%c0_12, %c0_13] : memref<128x128xf32, #tpu.memory_space<vmem>>, vector<128x128xf32>
    %cst_14 = arith.constant dense<0.000000e+00> : vector<16x128xf32>
    %29 = tpu.matmul %27, %28, %cst_14 {dimension_numbers = #tpu.dot_dimension_numbers<[1], [0], [0], [1], [0, 0, 1, 1], [], []>} : vector<16x128xf32>, vector<128x128xf32>, vector<16x128xf32> -> vector<16x128xf32>
    %30 = vector.broadcast %2 : vector<1x128xf32> to vector<16x128xf32>
    %31 = arith.addf %29, %30 : vector<16x128xf32>
    %32 = arith.addf %3, %31 : vector<16x128xf32>
    %c0_15 = arith.constant 0 : index
    %c0_16 = arith.constant 0 : index
    %33 = vector.load %arg6[%c0_15, %c0_16] : memref<16x128xf32, #tpu.memory_space<vmem>>, vector<16x128xf32>
    tpu.vector_store %arg6[%c0_15, %c0_16], %32 {strides = array<i32>} : memref<16x128xf32, #tpu.memory_space<vmem>>, vector<16x128xf32>,
    return
  }
  func.func @transform_0(%arg0: i32) -> (i32, i32) {
    %c0_i32 = arith.constant 0 : i32
    %c0_i32_0 = arith.constant 0 : i32
    return %arg0, %c0_i32 : i32, i32
  }
  func.func @transform_1(%arg0: i32) -> (i32, i32) {
    %c0_i32 = arith.constant 0 : i32
    %c0_i32_0 = arith.constant 0 : i32
    %c0_i32_1 = arith.constant 0 : i32
    return %c0_i32, %c0_i32_0 : i32, i32
  }
  func.func @transform_2(%arg0: i32) -> (i32, i32) {
    %c0_i32 = arith.constant 0 : i32
    %c0_i32_0 = arith.constant 0 : i32
    %c0_i32_1 = arith.constant 0 : i32
    return %c0_i32, %c0_i32_0 : i32, i32
  }
  func.func @transform_3(%arg0: i32) -> (i32, i32) {
    %c0_i32 = arith.constant 0 : i32
    %c0_i32_0 = arith.constant 0 : i32
    %c0_i32_1 = arith.constant 0 : i32
    return %c0_i32, %c0_i32_0 : i32, i32
  }
  func.func @transform_4(%arg0: i32) -> (i32, i32) {
    %c0_i32 = arith.constant 0 : i32
    %c0_i32_0 = arith.constant 0 : i32
    %c0_i32_1 = arith.constant 0 : i32
    return %c0_i32, %c0_i32_0 : i32, i32
  }
  func.func @transform_5(%arg0: i32) -> (i32, i32) {
    %c0_i32 = arith.constant 0 : i32
    %c0_i32_0 = arith.constant 0 : i32
    return %arg0, %c0_i32 : i32, i32
  }
}

</mosaic_0001>

<llo_original>
// kernel: tpu_custom_call.1
$region0: #{tpu_custom_call.1}
  #allocation0 [shape = 'u32[]', space=smem, size = 0x4, offset = 0x4, fixed_abs, tag = 'smem constant byte address 0x4 - core index']
  #allocation1 [shape = 'u32[72,128]{1,0:T(1,128)}', space=vmem, size = 0x9000, scoped, tag = 'internal scratch']
  %s0 = inlined_call_operand.hbm [shape: f32[16,128], index: 0, kind: input, shape index: {}]
  %s1 = inlined_call_operand.hbm [shape: f32[128,128], index: 1, kind: input, shape index: {}]
  %s2 = inlined_call_operand.vmem [shape: f32[1,128], index: 2, kind: input, shape index: {}]
  %s3 = inlined_call_operand.vmem [shape: f32[1,128], index: 3, kind: input, shape index: {}]
  %s4 = inlined_call_operand.vmem [shape: f32[1,128], index: 4, kind: input, shape index: {}]
  %s5 = inlined_call_operand.hbm [shape: f32[16,128], index: 5, kind: output, shape index: {}]
  %s6 = sld [smem:[#allocation0]]
  $region38: #{tpu_custom_call.1} parent=0
    _
  %s8 = ssub.s32 1, %s6
  %s9 = scalar_select 0, %s8, %s6
  $region1: #{tpu_custom_call.1} parent=0
    #allocation2 [shape = 'u8[8192]{0}', space=vmem, size = 0x2000, scoped, tag = 'input window, operand 0, single buffered']
    #allocation3 [shape = 's32[1]{0}', space=sflag, size = 0x4, scoped, tag = 'scoped memory for tpu_custom_call.1']
    #allocation4 [shape = 's32[1]{0}', space=sflag, size = 0x4, scoped, tag = 'scoped memory for tpu_custom_call.1']
    #allocation5 [shape = 'u8[65536]{0}', space=vmem, size = 0x10000, scoped, tag = 'input window, operand 1, single buffered']
    #allocation6 [shape = 's32[1]{0}', space=sflag, size = 0x4, scoped, tag = 'scoped memory for tpu_custom_call.1']
    #allocation7 [shape = 'u8[8192]{0}', space=vmem, size = 0x2000, scoped, tag = 'output window, operand 0, single buffered']
    %10 = vsyncpa [#allocation3], 0
    %11 = vsyncpa [#allocation6], 0
    %12 = vsyncpa [#allocation4], 0
    // Predicated region
    $region2: #{tpu_custom_call.1} parent=1 // pred_check
      _
    $region3: #{tpu_custom_call.1} parent=1 // pred_check_branch
      %14 = sbr.rel (0) target = $region5
    $region4: #{tpu_custom_call.1} parent=1 // pred_region
      %16 = vsyncadd [#allocation3], 0
      %s17 = sshll.u32 %s0, 4
      %s18 = int_to_ptr.hbm [resolvable:$true] %s17
      %s19 = sshll.u32 [#allocation2], 4
      %s20 = int_to_ptr.vmem [resolvable:$true] %s19
      %25 = dma.hbm_to_vmem [thread:$0]  %s18, 256, %s20, [#allocation3], 128, 128, 8
    $region5: #{tpu_custom_call.1} parent=1 // pred_fallthru
      _
    // Predicated region
    $region6: #{tpu_custom_call.1} parent=1 // pred_check
      _
    $region7: #{tpu_custom_call.1} parent=1 // pred_check_branch
      %27 = sbr.rel (0) target = $region9
    $region8: #{tpu_custom_call.1} parent=1 // pred_region
      %29 = vsyncadd [#allocation6], 0
      %s30 = sshll.u32 %s1, 4
      %s31 = int_to_ptr.hbm [resolvable:$true] %s30
      %s32 = sshll.u32 [#allocation5], 4
      %s33 = int_to_ptr.vmem [resolvable:$true] %s32
      %38 = dma.hbm_to_vmem [thread:$0]  %s31, 2048, %s33, [#allocation6], 128, 128, 8
    $region9: #{tpu_custom_call.1} parent=1 // pred_fallthru
      _
    // Predicated region
    $region10: #{tpu_custom_call.1} parent=1 // pred_check
      _
    $region11: #{tpu_custom_call.1} parent=1 // pred_check_branch
      %40 = sbr.rel (0) target = $region13
    $region12: #{tpu_custom_call.1} parent=1 // pred_region
      _
    $region13: #{tpu_custom_call.1} parent=1 // pred_fallthru
      _
    // Predicated region
    $region14: #{tpu_custom_call.1} parent=1 // pred_check
      _
    $region15: #{tpu_custom_call.1} parent=1 // pred_check_branch
      %42 = sbr.rel (0) target = $region17
    $region16: #{tpu_custom_call.1} parent=1 // pred_region
      _
    $region17: #{tpu_custom_call.1} parent=1 // pred_fallthru
      _
    // Predicated region
    $region18: #{tpu_custom_call.1} parent=1 // pred_check
      _
    $region19: #{tpu_custom_call.1} parent=1 // pred_check_branch
      %44 = sbr.rel (0) target = $region21
    $region20: #{tpu_custom_call.1} parent=1 // pred_region
      _
    $region21: #{tpu_custom_call.1} parent=1 // pred_fallthru
      _
    // Predicated region
    $region22: #{tpu_custom_call.1} parent=1 // pred_check
      _
    $region23: #{tpu_custom_call.1} parent=1 // pred_check_branch
      %46 = sbr.rel (0) target = $region25
    $region24: #{tpu_custom_call.1} parent=1 // pred_region
      %48 = dma.done [#allocation3], 256
    $region25: #{tpu_custom_call.1} parent=1 // pred_fallthru
      _
    // Predicated region
    $region26: #{tpu_custom_call.1} parent=1 // pred_check
      _
    $region27: #{tpu_custom_call.1} parent=1 // pred_check_branch
      %50 = sbr.rel (0) target = $region29
    $region28: #{tpu_custom_call.1} parent=1 // pred_region
      %52 = dma.done [#allocation6], 2048
    $region29: #{tpu_custom_call.1} parent=1 // pred_fallthru
      _
    %v53 = vld [vmem:[%s3] sm:$0x1]
    %v54 = vld [vmem:[%s4] sm:$0x1]
    %v55 = vld [vmem:[%s2] sm:$0x1]
    %v56 = vld [vmem:[#allocation2] sm:$0xff]
    %v57 = vld [vmem:[#allocation2 + $0x8] sm:$0xff]
    %58 = vadd.xlane.f32.xlu0 %v56
    %v59 = vpop.xlane.xlu0 %58
    %60 = vadd.xlane.f32.xlu0 %v57
    %v61 = vpop.xlane.xlu0 %60
    %v62 = vmul.f32 %v56, %v56
    %v63 = vmul.f32 %v57, %v57
    %64 = vadd.xlane.f32.xlu0 %v62
    %v65 = vpop.xlane.xlu0 %64
    %66 = vadd.xlane.f32.xlu0 %v63
    %v67 = vpop.xlane.xlu0 %66
    %v68 = vmul.f32 %v59, 0.0078125
    %v69 = vmul.f32 %v61, 0.0078125
    %v70 = vmul.f32 %v65, 0.0078125
    %v71 = vmul.f32 %v67, 0.0078125
    %v72 = vmul.f32 %v68, %v68
    %v73 = vmul.f32 %v69, %v69
    %v74 = vsub.f32 %v70, %v72
    %v75 = vsub.f32 %v71, %v73
    %v76 = vmax.f32 %v74, 0.0
    %v77 = vmax.f32 %v75, 0.0
    %v78 = vsub.f32 %v56, %v68
    %v79 = vsub.f32 %v57, %v69
    %v80 = vadd.f32 %v76, 1e-05
    %v81 = vadd.f32 %v77, 1e-05
    %v82 = vrsqrt.pop %v80
    %v83 = vmul.f32 %v82, %v80
    %v84 = vmul.f32 %v83, %v82
    %v85 = vmul.f32 0.5, %v84
    %v86 = vsub.f32 1.5, %v85
    %v87 = vmul.f32 %v82, %v86
    %vm88 = vweird.f32 %v80
    %vm89 = vweird.f32 %v82
    %vm90 = vmor %vm88, %vm89
    %v91 = vsel %vm90, %v82, %v87
    %v92 = vrsqrt.pop %v81
    %v93 = vmul.f32 %v92, %v81
    %v94 = vmul.f32 %v93, %v92
    %v95 = vmul.f32 0.5, %v94
    %v96 = vsub.f32 1.5, %v95
    %v97 = vmul.f32 %v92, %v96
    %vm98 = vweird.f32 %v81
    %vm99 = vweird.f32 %v92
    %vm100 = vmor %vm98, %vm99
    %v101 = vsel %vm100, %v92, %v97
    %v102 = vmul.f32 %v78, %v91
    %v103 = vmul.f32 %v79, %v101
    %v105 = vperm.slane %v53, 0
    %v107 = vmul.f32 %v102, %v105
    %v108 = vmul.f32 %v103, %v105
    %v110 = vperm.slane %v54, 0
    %v112 = vadd.f32 %v107, %v110
    %v113 = vadd.f32 %v108, %v110
    %v114 = vld [vmem:[#allocation5] sm:$0xff]
    %v115 = vld [vmem:[#allocation5 + $0x8] sm:$0xff]
    %v116 = vld [vmem:[#allocation5 + $0x10] sm:$0xff]
    %v117 = vld [vmem:[#allocation5 + $0x18] sm:$0xff]
    %v118 = vld [vmem:[#allocation5 + $0x20] sm:$0xff]
    %v119 = vld [vmem:[#allocation5 + $0x28] sm:$0xff]
    %v120 = vld [vmem:[#allocation5 + $0x30] sm:$0xff]
    %v121 = vld [vmem:[#allocation5 + $0x38] sm:$0xff]
    %v122 = vld [vmem:[#allocation5 + $0x40] sm:$0xff]
    %v123 = vld [vmem:[#allocation5 + $0x48] sm:$0xff]
    %v124 = vld [vmem:[#allocation5 + $0x50] sm:$0xff]
    %v125 = vld [vmem:[#allocation5 + $0x58] sm:$0xff]
    %v126 = vld [vmem:[#allocation5 + $0x60] sm:$0xff]
    %v127 = vld [vmem:[#allocation5 + $0x68] sm:$0xff]
    %v128 = vld [vmem:[#allocation5 + $0x70] sm:$0xff]
    %v129 = vld [vmem:[#allocation5 + $0x78] sm:$0xff]
    %v131 = vperm.slane %v55, 0
    %133 = vmatpush.msra.mxu0 %v129
    %134 = vmatpush.msra.mxu0 %v128
    %135 = vmatpush.msra.mxu0 %v127
    %136 = vmatpush.msra.mxu0 %v126
    %137 = vmatpush.msra.mxu0 %v125
    %138 = vmatpush.msra.mxu0 %v124
    %139 = vmatpush.msra.mxu0 %v123
    %140 = vmatpush.msra.mxu0 %v122
    %141 = vmatpush.msra.mxu0 %v121
    %142 = vmatpush.msra.mxu0 %v120
    %143 = vmatpush.msra.mxu0 %v119
    %144 = vmatpush.msra.mxu0 %v118
    %145 = vmatpush.msra.mxu0 %v117
    %146 = vmatpush.msra.mxu0 %v116
    %147 = vmatpush.msra.mxu0 %v115
    %148 = vmatpush.msra.mxu0 %v114
    %149 = vmatmul.f32.gmra.mxu0 %v112
    %v150 = vpop.f32.mrf.mxu0
    %v151 = vadd.f32 %v131, %v150
    %152 = vmatmul.f32.gmra.mxu0 %v113
    %v153 = vpop.f32.mrf.mxu0
    %v154 = vadd.f32 %v131, %v153
    %155 = vdwg.mxu0
    %v156 = vadd.f32 %v56, %v151
    %v157 = vadd.f32 %v57, %v154
    %158 = vst [vmem:[#allocation7] sm:$0xff] %v156
    %159 = vst [vmem:[#allocation7 + $0x8] sm:$0xff] %v157
    // Predicated region
    $region30: #{tpu_custom_call.1} parent=1 // pred_check
      _
    $region31: #{tpu_custom_call.1} parent=1 // pred_check_branch
      %161 = sbr.rel (0) target = $region33
    $region32: #{tpu_custom_call.1} parent=1 // pred_region
      %163 = vsyncadd [#allocation4], 0
      %s164 = sshll.u32 [#allocation7], 4
      %s165 = int_to_ptr.vmem [resolvable:$true] %s164
      %s166 = sshll.u32 %s5, 4
      %s167 = int_to_ptr.hbm [resolvable:$true] %s166
      %172 = dma.vmem_to_hbm [thread:$0]  %s165, 256, %s167, [#allocation4], 128, 128, 8
    $region33: #{tpu_custom_call.1} parent=1 // pred_fallthru
      _
    // Predicated region
    $region34: #{tpu_custom_call.1} parent=1 // pred_check
      _
    $region35: #{tpu_custom_call.1} parent=1 // pred_check_branch
      %174 = sbr.rel (0) target = $region37
    $region36: #{tpu_custom_call.1} parent=1 // pred_region
      %176 = dma.done [#allocation4], 256
    $region37: #{tpu_custom_call.1} parent=1 // pred_fallthru
      _
    %177 = vsyncpa [#allocation3], 1
    %178 = vsyncpa [#allocation6], 1
    %179 = vsyncpa [#allocation4], 1

</llo_original>
